<compile_context>
chip_gen: v5e
topology: v5e:2x2
jax: 0.10.0
libtpu: 0.0.40
codegen_flags: <defaults>
</compile_context>

<pallas_src>
import jax
import jax.numpy as jnp
from jax import lax
from jax.experimental import pallas as pl
from jax.experimental.pallas import tpu as pltpu


def _round_up(x, m):
    return (x + m - 1) // m * m


def _make_kernel(tl, mh, md, compute_dtype):
    TL, Mh, Md = tl, mh, md

    def kernel(x_ref, wproj_ref, bproj_ref, wbig_ref, out_ref, hp_ref, dp_ref):
        # ---- fused head/dep projection, computed once per batch element ----
        # (label-tile axis is innermost; scratch hp/dp carried across tiles)
        @pl.when(pl.program_id(1) == 0)
        def _():
            hd = jnp.dot(x_ref[...], wproj_ref[...],
                         preferred_element_type=jnp.float32)        # (S, Md+Mh)
            hd = jnp.maximum(hd + bproj_ref[...], 0.0)
            # columns [0:Md) = dep half (lane-padded), [Md:Md+Mh) = head half.
            # The biaffine "ones" columns come from zero-weight/bias-1 columns,
            # padding columns are exact zeros -> no bias-slicing needed below.
            dp_ref[...] = hd[:, :Md].astype(dp_ref.dtype)            # (S, Md)
            hp_ref[...] = hd[:, Md:Md + Mh].astype(hp_ref.dtype)     # (S, Mh)

        hp = hp_ref[...]                                             # (S, Mh)
        dp = dp_ref[...]                                             # (S, Md)

        # ---- biaffine for the TL labels of this tile ------------------------
        # u[(o,i), y] = sum_j W[o,i,j] * dp[y,j]   -- one 2-D MXU matmul,
        # contraction over the lane-padded dep axis, f32 accumulation.
        u = lax.dot_general(wbig_ref[...], dp,
                            (((1,), (1,)), ((), ())),
                            preferred_element_type=jnp.float32)      # (TL*Mh, S)

        # scores[o, x, y] = sum_i hp[x, i] * u[(o,i), y]
        # Short static loop of 2-D matmuls (no broadcast_to materialization).
        for o in range(TL):
            u_o = u[o * Mh:(o + 1) * Mh, :].astype(compute_dtype)    # (Mh, S)
            s_o = jnp.dot(hp, u_o, preferred_element_type=jnp.float32)
            out_ref[o] = s_o.astype(out_ref.dtype)                   # (S, S)

    return kernel


def pack_remote_parser_params(wh, bh, wd, bd, w_bi, *,
                              label_tile=None,
                              compute_dtype=jnp.bfloat16):
    """Build the fused/padded weights ONCE (parameter-init time, not per call).

    Layout:
      w_proj (D, Md+Mh): [Wd | 0-pad | Wh | 0-pad], ones-bias columns folded in.
      w_big  (Lp*Mh, Md): biaffine weight, head axis padded to 16, dep axis to 128,
                          labels padded to a multiple of label_tile.
    """
    D, M = wh.shape
    L = w_bi.shape[0]
    assert w_bi.shape == (L, M + 1, M + 1)

    Md = _round_up(M + 1, 128)          # dep features: lane / contraction dim
    Mh = _round_up(M + 1, 16)           # head features: sublane granularity only
    TL = min(L, 8) if label_tile is None else int(label_tile)
    nL = -(-L // TL)
    Lp = nL * TL

    f32 = jnp.float32
    w_proj = jnp.zeros((D, Md + Mh), f32)
    w_proj = w_proj.at[:, :M].set(wd).at[:, Md:Md + M].set(wh)
    b_proj = jnp.zeros((1, Md + Mh), f32)
    b_proj = b_proj.at[0, :M].set(bd).at[0, M].set(1.0)          # dep ones col
    b_proj = b_proj.at[0, Md:Md + M].set(bh).at[0, Md + M].set(1.0)  # head ones col

    w_pad = jnp.zeros((Lp, Mh, Md), f32).at[:L, :M + 1, :M + 1].set(w_bi)
    w_big = w_pad.reshape(Lp * Mh, Md)

    return {
        "w_proj": w_proj.astype(compute_dtype),
        "b_proj": b_proj,                       # f32: added after f32 accumulation
        "w_big": w_big.astype(compute_dtype),
        "meta": (M, L, Lp, TL, Mh, Md),
        "compute_dtype": compute_dtype,
    }


def remote_parser_forward(span_vectors, packed, out_dtype=jnp.float32):
    """span_vectors: (B, S, D) f32.  Returns (B, L, S, S) in out_dtype."""
    B, S, D = span_vectors.shape
    M, L, Lp, TL, Mh, Md = packed["meta"]
    compute_dtype = packed["compute_dtype"]
    nL = Lp // TL
    Mtot = Md + Mh

    x = span_vectors.astype(compute_dtype)
    kernel = _make_kernel(TL, Mh, Md, compute_dtype)

    itm = jnp.dtype(compute_dtype).itemsize
    flops = 2 * B * (S * D * Mtot + Lp * Mh * Md * S + Lp * S * Mh * S)
    bytes_accessed = (B * S * D * itm                    # activations
                      + (D + 1) * Mtot * itm             # projection weights
                      + B * Lp * Mh * Md * itm           # biaffine weight (re-streamed / batch)
                      + B * Lp * S * S * jnp.dtype(out_dtype).itemsize)

    out = pl.pallas_call(
        kernel,
        out_shape=jax.ShapeDtypeStruct((B, Lp, S, S), out_dtype),
        grid_spec=pltpu.PrefetchScalarGridSpec(
            num_scalar_prefetch=0,
            grid=(B, nL),                                  # label tiles innermost
            in_specs=[
                pl.BlockSpec((None, S, D), lambda b, l: (b, 0, 0)),     # x (per batch)
                pl.BlockSpec((D, Mtot), lambda b, l: (0, 0)),           # fused W_proj
                pl.BlockSpec((1, Mtot), lambda b, l: (0, 0)),           # fused bias
                pl.BlockSpec((TL * Mh, Md), lambda b, l: (l, 0)),       # biaffine tile
            ],
            out_specs=pl.BlockSpec((None, TL, S, S), lambda b, l: (b, l, 0, 0)),
            scratch_shapes=[
                pltpu.VMEM((S, Mh), compute_dtype),        # hp, reused across label tiles
                pltpu.VMEM((S, Md), compute_dtype),        # dp, reused across label tiles
            ],
        ),
        compiler_params=pltpu.CompilerParams(
            # batch axis parallel (megacore); label axis carries the projection
            # scratch so it must stay "arbitrary".
            dimension_semantics=("parallel", "arbitrary"),
            vmem_limit_bytes=32 * 1024 * 1024,
        ),
        cost_estimate=pl.CostEstimate(flops=int(flops), transcendentals=0,
                                      bytes_accessed=int(bytes_accessed)),
    )(x, packed["w_proj"], packed["b_proj"], packed["w_big"])

    return out[:, :L] if Lp != L else out


def reference_forward(span_vectors, wh, bh, wd, bd, w_bi):
    """Pure-JAX reference mirroring the PyTorch module."""
    h = jax.nn.relu(span_vectors @ wh + bh)
    d = jax.nn.relu(span_vectors @ wd + bd)
    ones = jnp.ones(h.shape[:-1] + (1,), h.dtype)
    hp = jnp.concatenate([h, ones], -1)
    dp = jnp.concatenate([d, ones], -1)
    return jnp.einsum('bxi,oij,byj->boxy', hp, w_bi, dp)


if __name__ == "__main__":
    # Small shapes consistent with the module:
    B, S = 2, 8          # batch, number of spans
    SPAN_DIM = 32        # span_dim
    MLP_DIM = 32         # mlp_dim
    N_LABELS = 4         # vocab.get_vocab_size('remote_labels')

    key = jax.random.PRNGKey(0)
    k_x, k_wh, k_bh, k_wd, k_bd, k_bi = jax.random.split(key, 6)

    span_vectors = jax.random.normal(k_x, (B, S, SPAN_DIM), jnp.float32)
    wh = 0.1 * jax.random.normal(k_wh, (SPAN_DIM, MLP_DIM), jnp.float32)
    bh = 0.1 * jax.random.normal(k_bh, (MLP_DIM,), jnp.float32)
    wd = 0.1 * jax.random.normal(k_wd, (SPAN_DIM, MLP_DIM), jnp.float32)
    bd = 0.1 * jax.random.normal(k_bd, (MLP_DIM,), jnp.float32)
    w_bi = 0.1 * jax.random.normal(k_bi, (N_LABELS, MLP_DIM + 1, MLP_DIM + 1),
                                   jnp.float32)

    ref = reference_forward(span_vectors, wh, bh, wd, bd, w_bi)

    # Exact f32 path, single label tile (nL = 1).
    packed_f32 = pack_remote_parser_params(wh, bh, wd, bd, w_bi,
                                           compute_dtype=jnp.float32)
    out_f32 = jax.block_until_ready(remote_parser_forward(span_vectors, packed_f32))
    assert out_f32.shape == (B, N_LABELS, S, S)
    assert jnp.allclose(out_f32, ref, atol=1e-3, rtol=1e-3)

    # f32 path with label tiling that does NOT divide L (exercises label padding
    # + multi-step label axis + projection-scratch reuse).
    packed_f32_t = pack_remote_parser_params(wh, bh, wd, bd, w_bi,
                                             label_tile=3,
                                             compute_dtype=jnp.float32)
    out_f32_t = jax.block_until_ready(remote_parser_forward(span_vectors, packed_f32_t))
    assert out_f32_t.shape == (B, N_LABELS, S, S)
    assert jnp.allclose(out_f32_t, ref, atol=1e-3, rtol=1e-3)

    # bf16 MXU-operand path (v5e/v6e-friendly), f32 accumulation, 2 label tiles.
    packed_bf16 = pack_remote_parser_params(wh, bh, wd, bd, w_bi,
                                            label_tile=2,
                                            compute_dtype=jnp.bfloat16)
    out_bf16 = jax.block_until_ready(remote_parser_forward(span_vectors, packed_bf16))
    assert out_bf16.shape == (B, N_LABELS, S, S)
    assert jnp.allclose(out_bf16, ref, atol=1e-1, rtol=1e-1)

    # TODO(synk): score/get_loss/predict/restore_remote are host-side control
    # flow (Python loops over ragged spans, CrossEntropyLoss, passage graph
    # edits) and are not part of the forward hot path; not translated.
    print("KERNEL_OK")
</pallas_src>

<mosaic_0001>
module attributes {stable_mosaic.version = 11 : i64} {
  func.func @kernel(%arg0: i32, %arg1: i32, %arg2: memref<1x8x32xf32, #tpu.memory_space<vmem>>, %arg3: memref<32x176xf32, #tpu.memory_space<vmem>>, %arg4: memref<1x176xf32, #tpu.memory_space<vmem>>, %arg5: memref<192x128xf32, #tpu.memory_space<vmem>>, %arg6: memref<1x4x8x8xf32, #tpu.memory_space<vmem>>, %arg7: memref<8x48xf32, #tpu.memory_space<vmem>>, %arg8: memref<8x128xf32, #tpu.memory_space<vmem>>) attributes {dimension_semantics = [#tpu.dimension_semantics<parallel>, #tpu.dimension_semantics<arbitrary>], iteration_bounds = array<i64: 2, 1>, scalar_prefetch = 0 : i64, scratch_operands = 2 : i64, tpu.core_type = #tpu.core_type<tc>, window_params = [{transform_indices = @transform_0, window_bounds = array<i64: 1, 8, 32>}, {pipeline_mode = #tpu.pipeline_mode<synchronous>, transform_indices = @transform_1, window_bounds = array<i64: 32, 176>}, {pipeline_mode = #tpu.pipeline_mode<synchronous>, transform_indices = @transform_2, window_bounds = array<i64: 1, 176>}, {transform_indices = @transform_3, window_bounds = array<i64: 192, 128>}, {transform_indices = @transform_4, window_bounds = array<i64: 1, 4, 8, 8>}]} {
    %c0_i32 = arith.constant 0 : i32
    %0 = arith.cmpi eq, %arg1, %c0_i32 : i32
    %1 = arith.extui %0 : i1 to i32
    %c0_i32_0 = arith.constant 0 : i32
    %2 = arith.cmpi ne, %1, %c0_i32_0 : i32
    scf.if %2 {
      %c0_23 = arith.constant 0 : index
      %c0_24 = arith.constant 0 : index
      %c0_25 = arith.constant 0 : index
      %27 = vector.load %arg2[%c0_23, %c0_24, %c0_25] : memref<1x8x32xf32, #tpu.memory_space<vmem>>, vector<1x8x32xf32>
      %28 = vector.shape_cast %27 : vector<1x8x32xf32> to vector<8x32xf32>
      %c0_26 = arith.constant 0 : index
      %c0_27 = arith.constant 0 : index
      %29 = vector.load %arg3[%c0_26, %c0_27] : memref<32x176xf32, #tpu.memory_space<vmem>>, vector<32x176xf32>
      %cst_28 = arith.constant dense<0.000000e+00> : vector<8x176xf32>
      %30 = tpu.matmul %28, %29, %cst_28 {dimension_numbers = #tpu.dot_dimension_numbers<[1], [0], [0], [1], [0, 0, 1, 1], [], []>} : vector<8x32xf32>, vector<32x176xf32>, vector<8x176xf32> -> vector<8x176xf32>
      %c0_29 = arith.constant 0 : index
      %c0_30 = arith.constant 0 : index
      %31 = vector.load %arg4[%c0_29, %c0_30] : memref<1x176xf32, #tpu.memory_space<vmem>>, vector<1x176xf32>
      %32 = vector.broadcast %31 : vector<1x176xf32> to vector<8x176xf32>
      %33 = arith.addf %30, %32 : vector<8x176xf32>
      %cst_31 = arith.constant 0.000000e+00 : f32
      %34 = vector.broadcast %cst_31 : f32 to vector<8x176xf32>
      %35 = arith.maximumf %33, %34 : vector<8x176xf32>
      %36 = vector.extract_strided_slice %35 {offsets = [0, 0], sizes = [8, 128], strides = [1, 1]} : vector<8x176xf32> to vector<8x128xf32>
      %c0_32 = arith.constant 0 : index
      %c0_33 = arith.constant 0 : index
      %37 = vector.load %arg8[%c0_32, %c0_33] : memref<8x128xf32, #tpu.memory_space<vmem>>, vector<8x128xf32>
      tpu.vector_store %arg8[%c0_32, %c0_33], %36 {strides = array<i32>} : memref<8x128xf32, #tpu.memory_space<vmem>>, vector<8x128xf32>,
      %38 = vector.extract_strided_slice %35 {offsets = [0, 128], sizes = [8, 48], strides = [1, 1]} : vector<8x176xf32> to vector<8x48xf32>
      %c0_34 = arith.constant 0 : index
      %c0_35 = arith.constant 0 : index
      %39 = vector.load %arg7[%c0_34, %c0_35] : memref<8x48xf32, #tpu.memory_space<vmem>>, vector<8x48xf32>
      tpu.vector_store %arg7[%c0_34, %c0_35], %38 {strides = array<i32>} : memref<8x48xf32, #tpu.memory_space<vmem>>, vector<8x48xf32>,
    } else {
    }
    %c0 = arith.constant 0 : index
    %c0_1 = arith.constant 0 : index
    %3 = vector.load %arg7[%c0, %c0_1] : memref<8x48xf32, #tpu.memory_space<vmem>>, vector<8x48xf32>
    %c0_2 = arith.constant 0 : index
    %c0_3 = arith.constant 0 : index
    %4 = vector.load %arg8[%c0_2, %c0_3] : memref<8x128xf32, #tpu.memory_space<vmem>>, vector<8x128xf32>
    %c0_4 = arith.constant 0 : index
    %c0_5 = arith.constant 0 : index
    %5 = vector.load %arg5[%c0_4, %c0_5] : memref<192x128xf32, #tpu.memory_space<vmem>>, vector<192x128xf32>
    %cst = arith.constant dense<0.000000e+00> : vector<192x8xf32>
    %6 = tpu.matmul %5, %4, %cst {dimension_numbers = #tpu.dot_dimension_numbers<[1], [1], [0], [0], [0, 0, 1, 0], [], []>} : vector<192x128xf32>, vector<8x128xf32>, vector<192x8xf32> -> vector<192x8xf32>
    %7 = vector.extract_strided_slice %6 {offsets = [0, 0], sizes = [48, 8], strides = [1, 1]} : vector<192x8xf32> to vector<48x8xf32>
    %cst_6 = arith.constant dense<0.000000e+00> : vector<8x8xf32>
    %8 = tpu.matmul %3, %7, %cst_6 {dimension_numbers = #tpu.dot_dimension_numbers<[1], [0], [0], [1], [0, 0, 1, 1], [], []>} : vector<8x48xf32>, vector<48x8xf32>, vector<8x8xf32> -> vector<8x8xf32>
    %c0_7 = arith.constant 0 : index
    %c0_8 = arith.constant 0 : index
    %c0_9 = arith.constant 0 : index
    %c0_10 = arith.constant 0 : index
    %9 = vector.load %arg6[%c0_7, %c0_8, %c0_9, %c0_10] : memref<1x4x8x8xf32, #tpu.memory_space<vmem>>, vector<1x1x8x8xf32>
    %10 = vector.shape_cast %9 : vector<1x1x8x8xf32> to vector<8x8xf32>
    %11 = vector.shape_cast %8 : vector<8x8xf32> to vector<1x1x8x8xf32>
    tpu.vector_store %arg6[%c0_7, %c0_8, %c0_9, %c0_10], %11 {strides = array<i32>} : memref<1x4x8x8xf32, #tpu.memory_space<vmem>>, vector<1x1x8x8xf32>,
    %12 = vector.extract_strided_slice %6 {offsets = [48, 0], sizes = [48, 8], strides = [1, 1]} : vector<192x8xf32> to vector<48x8xf32>
    %cst_11 = arith.constant dense<0.000000e+00> : vector<8x8xf32>
    %13 = tpu.matmul %3, %12, %cst_11 {dimension_numbers = #tpu.dot_dimension_numbers<[1], [0], [0], [1], [0, 0, 1, 1], [], []>} : vector<8x48xf32>, vector<48x8xf32>, vector<8x8xf32> -> vector<8x8xf32>
    %c0_12 = arith.constant 0 : index
    %c1 = arith.constant 1 : index
    %c0_13 = arith.constant 0 : index
    %c0_14 = arith.constant 0 : index
    %14 = vector.load %arg6[%c0_12, %c1, %c0_13, %c0_14] : memref<1x4x8x8xf32, #tpu.memory_space<vmem>>, vector<1x1x8x8xf32>
    %15 = vector.shape_cast %14 : vector<1x1x8x8xf32> to vector<8x8xf32>
    %16 = vector.shape_cast %13 : vector<8x8xf32> to vector<1x1x8x8xf32>
    tpu.vector_store %arg6[%c0_12, %c1, %c0_13, %c0_14], %16 {strides = array<i32>} : memref<1x4x8x8xf32, #tpu.memory_space<vmem>>, vector<1x1x8x8xf32>,
    %17 = vector.extract_strided_slice %6 {offsets = [96, 0], sizes = [48, 8], strides = [1, 1]} : vector<192x8xf32> to vector<48x8xf32>
    %cst_15 = arith.constant dense<0.000000e+00> : vector<8x8xf32>
    %18 = tpu.matmul %3, %17, %cst_15 {dimension_numbers = #tpu.dot_dimension_numbers<[1], [0], [0], [1], [0, 0, 1, 1], [], []>} : vector<8x48xf32>, vector<48x8xf32>, vector<8x8xf32> -> vector<8x8xf32>
    %c0_16 = arith.constant 0 : index
    %c2 = arith.constant 2 : index
    %c0_17 = arith.constant 0 : index
    %c0_18 = arith.constant 0 : index
    %19 = vector.load %arg6[%c0_16, %c2, %c0_17, %c0_18] : memref<1x4x8x8xf32, #tpu.memory_space<vmem>>, vector<1x1x8x8xf32>
    %20 = vector.shape_cast %19 : vector<1x1x8x8xf32> to vector<8x8xf32>
    %21 = vector.shape_cast %18 : vector<8x8xf32> to vector<1x1x8x8xf32>
    tpu.vector_store %arg6[%c0_16, %c2, %c0_17, %c0_18], %21 {strides = array<i32>} : memref<1x4x8x8xf32, #tpu.memory_space<vmem>>, vector<1x1x8x8xf32>,
    %22 = vector.extract_strided_slice %6 {offsets = [144, 0], sizes = [48, 8], strides = [1, 1]} : vector<192x8xf32> to vector<48x8xf32>
    %cst_19 = arith.constant dense<0.000000e+00> : vector<8x8xf32>
    %23 = tpu.matmul %3, %22, %cst_19 {dimension_numbers = #tpu.dot_dimension_numbers<[1], [0], [0], [1], [0, 0, 1, 1], [], []>} : vector<8x48xf32>, vector<48x8xf32>, vector<8x8xf32> -> vector<8x8xf32>
    %c0_20 = arith.constant 0 : index
    %c3 = arith.constant 3 : index
    %c0_21 = arith.constant 0 : index
    %c0_22 = arith.constant 0 : index
    %24 = vector.load %arg6[%c0_20, %c3, %c0_21, %c0_22] : memref<1x4x8x8xf32, #tpu.memory_space<vmem>>, vector<1x1x8x8xf32>
    %25 = vector.shape_cast %24 : vector<1x1x8x8xf32> to vector<8x8xf32>
    %26 = vector.shape_cast %23 : vector<8x8xf32> to vector<1x1x8x8xf32>
    tpu.vector_store %arg6[%c0_20, %c3, %c0_21, %c0_22], %26 {strides = array<i32>} : memref<1x4x8x8xf32, #tpu.memory_space<vmem>>, vector<1x1x8x8xf32>,
    return
  }
  func.func @transform_0(%arg0: i32, %arg1: i32) -> (i32, i32, i32) {
    %c0_i32 = arith.constant 0 : i32
    %c0_i32_0 = arith.constant 0 : i32
    %c0_i32_1 = arith.constant 0 : i32
    return %arg0, %c0_i32, %c0_i32_0 : i32, i32, i32
  }
  func.func @transform_1(%arg0: i32, %arg1: i32) -> (i32, i32) {
    %c0_i32 = arith.constant 0 : i32
    %c0_i32_0 = arith.constant 0 : i32
    %c0_i32_1 = arith.constant 0 : i32
    return %c0_i32, %c0_i32_0 : i32, i32
  }
  func.func @transform_2(%arg0: i32, %arg1: i32) -> (i32, i32) {
    %c0_i32 = arith.constant 0 : i32
    %c0_i32_0 = arith.constant 0 : i32
    %c0_i32_1 = arith.constant 0 : i32
    return %c0_i32, %c0_i32_0 : i32, i32
  }
  func.func @transform_3(%arg0: i32, %arg1: i32) -> (i32, i32) {
    %c0_i32 = arith.constant 0 : i32
    %c0_i32_0 = arith.constant 0 : i32
    return %arg1, %c0_i32 : i32, i32
  }
  func.func @transform_4(%arg0: i32, %arg1: i32) -> (i32, i32, i32, i32) {
    %c0_i32 = arith.constant 0 : i32
    %c0_i32_0 = arith.constant 0 : i32
    %c0_i32_1 = arith.constant 0 : i32
    return %arg0, %arg1, %c0_i32, %c0_i32_0 : i32, i32, i32, i32
  }
}

</mosaic_0001>

<llo_original>
// kernel: tpu_custom_call.1
$region0: #{tpu_custom_call.1}
  #allocation0 [shape = 'u32[]', space=smem, size = 0x4, offset = 0x4, fixed_abs, tag = 'smem constant byte address 0x4 - core index']
  #allocation1 [shape = 'u32[72,128]{1,0:T(1,128)}', space=vmem, size = 0x9000, scoped, tag = 'internal scratch']
  #allocation2 [shape = 'f32[8,48]{1,0:T(8,128)}', space=vmem, size = 0x1000, scoped, tag = 'scratch operand']
  #allocation3 [shape = 'f32[8,128]{1,0:T(8,128)}', space=vmem, size = 0x1000, scoped, tag = 'scratch operand']
  %s0 = inlined_call_operand.hbm [shape: f32[2,8,32], index: 0, kind: input, shape index: {}]
  %s1 = inlined_call_operand.hbm [shape: f32[32,176], index: 1, kind: input, shape index: {}]
  %s2 = inlined_call_operand.hbm [shape: f32[1,176], index: 2, kind: input, shape index: {}]
  %s3 = inlined_call_operand.hbm [shape: f32[192,128], index: 3, kind: input, shape index: {}]
  %s4 = inlined_call_operand.hbm [shape: f32[2,4,8,8], index: 4, kind: output, shape index: {}]
  %s5 = sld [smem:[#allocation0]]
  $region69: #{tpu_custom_call.1} parent=0
    _
  %s7 = ssub.s32 1, %s5
  %s8 = scalar_select 0, %s7, %s5
  $region1: #{tpu_custom_call.1} parent=0
    #allocation4 [shape = 'u8[8192]{0}', space=vmem, size = 0x2000, scoped, tag = 'input window, operand 0']
    #allocation5 [shape = 's32[2]{0}', space=sflag, size = 0x8, scoped, tag = 'scoped memory for tpu_custom_call.1']
    #allocation6 [shape = 's32[2]{0}', space=sflag, size = 0x8, scoped, tag = 'scoped memory for tpu_custom_call.1']
    #allocation7 [shape = 'u8[32768]{0}', space=vmem, size = 0x8000, scoped, tag = 'input window, operand 1, single buffered']
    #allocation8 [shape = 's32[1]{0}', space=sflag, size = 0x4, scoped, tag = 'scoped memory for tpu_custom_call.1']
    #allocation9 [shape = 'u8[1024]{0}', space=vmem, size = 0x400, scoped, tag = 'input window, operand 2, single buffered']
    #allocation10 [shape = 'u8[98304]{0}', space=vmem, size = 0x18000, scoped, tag = 'input window, operand 3, single buffered']
    #allocation11 [shape = 's32[1]{0}', space=sflag, size = 0x4, scoped, tag = 'scoped memory for tpu_custom_call.1']
    #allocation12 [shape = 'u8[32768]{0}', space=vmem, size = 0x8000, scoped, tag = 'output window, operand 0']
    %9 = vsyncpa [#allocation5], 0
    %s10 = scalar_lea.sflag [#allocation5], 1
    %11 = vsyncpa %s10, 0
    %12 = vsyncpa [#allocation8], 0
    %13 = vsyncpa [#allocation11], 0
    %14 = vsyncpa [#allocation6], 0
    %s15 = scalar_lea.sflag [#allocation6], 1
    %16 = vsyncpa %s15, 0
    loop: start=0, step=1, limit=4
    $region2: #{tpu_custom_call.1} parent=1 // loop_pre_header
      _
    $region3: #{tpu_custom_call.1} parent=1 // loop_header
      %s18 = sphi 0, %s22
      %p19 = scmp.ge.s32.totalorder %s18, 4
      %s25 = sphi 0, %s37
      %s26 = sphi 0, %s33
      %s27 = sphi 0, %s25
      %s28 = sphi 0, %s26
      %s29 = sphi 0, %s27
      %s30 = sphi 0, %s28
      %s40 = sphi 0, %s42
      %s43 = sphi 0, %s40
      %s44 = sphi 0, %s43
      %s60 = sphi 0, %s44
      %s64 = sphi 0, %s64
      %s66 = sphi 0, %s64
      %s67 = sphi 0, %s66
      %s81 = sphi 0, %s67
      %s85 = sphi 0, %s85
      %s87 = sphi 0, %s85
      %s88 = sphi 0, %s87
      %s102 = sphi 0, %s88
      %s108 = sphi 0, %s110
      %s111 = sphi 0, %s108
      %s112 = sphi 0, %s111
      %s128 = sphi 0, %s112
      %s136 = sphi 0, %s138
      %s139 = sphi 0, %s136
      %s140 = sphi 0, %s139
      %s156 = sphi 0, %s140
    $region4: #{tpu_custom_call.1} parent=1 // loop_header_branch
      %21 = sbr.rel (%p19) target = $region8
    $region5: #{tpu_custom_call.1} parent=1 // loop_body
      %s23 = ssub.s32 %s18, 1
      %s24 = ssub.s32 %s18, 2
      %s31 = sadd.s32 1, %s26
      %p32 = scmp.ge.s32.totalorder %s31, 1
      %s33 = scalar_select %p32, 0, %s31
      %s34 = sadd.s32 1, %s25
      %s35 = scalar_select %p32, %s34, %s25
      %p36 = scmp.ge.s32.totalorder %s35, 2
      %s37 = scalar_select %p36, 0, %s35
      %s38 = ssub.s32 %s25, %s37
      %p39 = scmp.eq.s32.totalorder %s38, 0
      %s41 = sadd.s32 %s40, 1
      %s42 = scalar_select %p39, %s40, %s41
      %p45 = pneg %p39
      %p46 = scmp.eq.s32.totalorder %s18, 1
      %p47 = por %p45, %p46
      %p48 = scmp.ne.s32.totalorder %s40, %s43
      %p49 = scmp.eq.s32.totalorder %s18, 0
      %p50 = por %p48, %p49
      %p51 = scmp.ne.s32.totalorder %s40, %s43
      %p52 = scmp.eq.s32.totalorder %s23, 1
      %p53 = por %p51, %p52
      %p54 = scmp.ne.s32.totalorder %s43, %s44
      %p55 = scmp.eq.s32.totalorder %s23, 0
      %p56 = por %p54, %p55
      %p57 = scmp.ne.s32.totalorder %s43, %s44
      %p58 = scmp.eq.s32.totalorder %s24, 1
      %p59 = por %p57, %p58
      %p61 = scmp.ne.s32.totalorder %s44, %s60
      %p62 = scmp.eq.s32.totalorder %s24, 0
      %p63 = por %p61, %p62
      %s65 = sadd.s32 %s64, 1
      %p68 = scmp.eq.s32.totalorder %s18, 1
      %p69 = scmp.ne.s32.totalorder %s64, %s66
      %p70 = scmp.eq.s32.totalorder %s18, 0
      %p71 = por %p69, %p70
      %p72 = scmp.ne.s32.totalorder %s64, %s66
      %p73 = scmp.eq.s32.totalorder %s23, 1
      %p74 = por %p72, %p73
      %p75 = scmp.ne.s32.totalorder %s66, %s67
      %p76 = scmp.eq.s32.totalorder %s23, 0
      %p77 = por %p75, %p76
      %p78 = scmp.ne.s32.totalorder %s66, %s67
      %p79 = scmp.eq.s32.totalorder %s24, 1
      %p80 = por %p78, %p79
      %p82 = scmp.ne.s32.totalorder %s67, %s81
      %p83 = scmp.eq.s32.totalorder %s24, 0
      %p84 = por %p82, %p83
      %s86 = sadd.s32 %s85, 1
      %p89 = scmp.eq.s32.totalorder %s18, 1
      %p90 = scmp.ne.s32.totalorder %s85, %s87
      %p91 = scmp.eq.s32.totalorder %s18, 0
      %p92 = por %p90, %p91
      %p93 = scmp.ne.s32.totalorder %s85, %s87
      %p94 = scmp.eq.s32.totalorder %s23, 1
      %p95 = por %p93, %p94
      %p96 = scmp.ne.s32.totalorder %s87, %s88
      %p97 = scmp.eq.s32.totalorder %s23, 0
      %p98 = por %p96, %p97
      %p99 = scmp.ne.s32.totalorder %s87, %s88
      %p100 = scmp.eq.s32.totalorder %s24, 1
      %p101 = por %p99, %p100
      %p103 = scmp.ne.s32.totalorder %s88, %s102
      %p104 = scmp.eq.s32.totalorder %s24, 0
      %p105 = por %p103, %p104
      %s106 = ssub.s32 %s26, %s33
      %p107 = scmp.eq.s32.totalorder %s106, 0
      %s109 = sadd.s32 %s108, 1
      %s110 = scalar_select %p107, %s108, %s109
      %p113 = pneg %p107
      %p114 = scmp.eq.s32.totalorder %s18, 1
      %p115 = por %p113, %p114
      %p116 = scmp.ne.s32.totalorder %s108, %s111
      %p117 = scmp.eq.s32.totalorder %s18, 0
      %p118 = por %p116, %p117
      %p119 = scmp.ne.s32.totalorder %s108, %s111
      %p120 = scmp.eq.s32.totalorder %s23, 1
      %p121 = por %p119, %p120
      %p122 = scmp.ne.s32.totalorder %s111, %s112
      %p123 = scmp.eq.s32.totalorder %s23, 0
      %p124 = por %p122, %p123
      %p125 = scmp.ne.s32.totalorder %s111, %s112
      %p126 = scmp.eq.s32.totalorder %s24, 1
      %p127 = por %p125, %p126
      %p129 = scmp.ne.s32.totalorder %s112, %s128
      %p130 = scmp.eq.s32.totalorder %s24, 0
      %p131 = por %p129, %p130
      %s132 = ssub.s32 %s25, %s37
      %s133 = ssub.s32 %s26, %s33
      %s134 = sor.u32 %s132, %s133
      %p135 = scmp.eq.s32.totalorder %s134, 0
      %s137 = sadd.s32 %s136, 1
      %s138 = scalar_select %p135, %s136, %s137
      %p141 = pneg %p135
      %p142 = scmp.eq.s32.totalorder %s18, 1
      %p143 = por %p141, %p142
      %p144 = scmp.ne.s32.totalorder %s136, %s139
      %p145 = scmp.eq.s32.totalorder %s18, 0
      %p146 = por %p144, %p145
      %p147 = scmp.ne.s32.totalorder %s136, %s139
      %p148 = scmp.eq.s32.totalorder %s23, 1
      %p149 = por %p147, %p148
      %p150 = scmp.ne.s32.totalorder %s139, %s140
      %p151 = scmp.eq.s32.totalorder %s23, 0
      %p152 = por %p150, %p151
      %p153 = scmp.ne.s32.totalorder %s139, %s140
      %p154 = scmp.eq.s32.totalorder %s24, 1
      %p155 = por %p153, %p154
      %p157 = scmp.ne.s32.totalorder %s140, %s156
      %p158 = scmp.eq.s32.totalorder %s24, 0
      %p159 = por %p157, %p158
      %p160 = scmp.le.s32.totalorder 1, %s18
      %p161 = scmp.lt.s32.totalorder %s18, 3
      %p162 = pnand %p160, %p161
      %p163 = pneg %p162
      // Predicated region
      $region9: #{tpu_custom_call.1} parent=5 // pred_check
        _
      $region10: #{tpu_custom_call.1} parent=5 // pred_check_branch
        %165 = sbr.rel (%p162) target = $region12
      $region11: #{tpu_custom_call.1} parent=5 // pred_region
        %s166 = ssub.s32 %s18, 1
        // Predicated region
        $region13: #{tpu_custom_call.1} parent=11 // pred_check
          %p167 = pneg %p77
        $region14: #{tpu_custom_call.1} parent=11 // pred_check_branch
          %169 = sbr.rel (%p167) target = $region16
        $region15: #{tpu_custom_call.1} parent=11 // pred_region
          %171 = vsyncadd [#allocation8], 0
          %s172 = sshll.u32 %s1, 4
          %s173 = int_to_ptr.hbm [resolvable:$true] %s172
          %s174 = sshll.u32 [#allocation7], 4
          %s175 = int_to_ptr.vmem [resolvable:$true] %s174
          %180 = dma.hbm_to_vmem [thread:$0]  %s173, 1024, %s175, [#allocation8], 256, 256, 16
        $region16: #{tpu_custom_call.1} parent=11 // pred_fallthru
          _
        // Predicated region
        $region17: #{tpu_custom_call.1} parent=11 // pred_check
          %p181 = pneg %p98
        $region18: #{tpu_custom_call.1} parent=11 // pred_check_branch
          %183 = sbr.rel (%p181) target = $region20
        $region19: #{tpu_custom_call.1} parent=11 // pred_region
          %185 = vsyncadd [#allocation8], 0
          %s187 = sshll.u32 %s2, 4
          %s188 = int_to_ptr.hbm [resolvable:$true] %s187
          %s189 = sshll.u32 [#allocation9], 4
          %s190 = int_to_ptr.vmem [resolvable:$true] %s189
          %192 = dma.hbm_to_vmem [thread:$0]  %s188, 32, %s190, [#allocation8]
        $region20: #{tpu_custom_call.1} parent=11 // pred_fallthru
          _
        // Predicated region
        $region21: #{tpu_custom_call.1} parent=11 // pred_check
          %p193 = pneg %p124
        $region22: #{tpu_custom_call.1} parent=11 // pred_check_branch
          %195 = sbr.rel (%p193) target = $region24
        $region23: #{tpu_custom_call.1} parent=11 // pred_region
          %s196 = smul.u32 24, %s28
          %198 = vsyncadd [#allocation11], 0
          %s199 = smul.addr %s196, 8
          %s200 = scalar_lea.hbm %s3, %s199
          %s201 = sshll.u32 %s200, 4
          %s202 = int_to_ptr.hbm [resolvable:$true] %s201
          %s203 = sshll.u32 [#allocation10], 4
          %s204 = int_to_ptr.vmem [resolvable:$true] %s203
          %209 = dma.hbm_to_vmem [thread:$0]  %s202, 3072, %s204, [#allocation11], 128, 128, 8
        $region24: #{tpu_custom_call.1} parent=11 // pred_fallthru
          _
      $region12: #{tpu_custom_call.1} parent=5 // pred_fallthru
        _
      %p210 = scmp.lt.s32.totalorder %s18, 2
      // Predicated region
      $region25: #{tpu_custom_call.1} parent=5 // pred_check
        %p211 = pneg %p210
      $region26: #{tpu_custom_call.1} parent=5 // pred_check_branch
        %213 = sbr.rel (%p211) target = $region28
      $region27: #{tpu_custom_call.1} parent=5 // pred_region
        // Predicated region
        $region29: #{tpu_custom_call.1} parent=27 // pred_check
          %p214 = pneg %p50
        $region30: #{tpu_custom_call.1} parent=27 // pred_check_branch
          %216 = sbr.rel (%p214) target = $region32
        $region31: #{tpu_custom_call.1} parent=27 // pred_region
          %s217 = sand.u32 %s40, 1
          %s218 = scalar_lea.sflag [#allocation5], %s217
          %s219 = sand.u32 %s40, 1
          %s220 = smul.addr %s219, 8
          %s221 = scalar_lea.vmem [#allocation4], %s220
          %223 = vsyncadd %s218, 0
          %s224 = smul.addr %s25, 8
          %s225 = scalar_lea.hbm %s0, %s224
          %s227 = sshll.u32 %s225, 4
          %s228 = int_to_ptr.hbm [resolvable:$true] %s227
          %s229 = sshll.u32 %s221, 4
          %s230 = int_to_ptr.vmem [resolvable:$true] %s229
          %232 = dma.hbm_to_vmem [thread:$0]  %s228, 128, %s230, %s218
        $region32: #{tpu_custom_call.1} parent=27 // pred_fallthru
          _
      $region28: #{tpu_custom_call.1} parent=5 // pred_fallthru
        _
      %p233 = scmp.le.s32.totalorder 1, %s18
      %p234 = scmp.lt.s32.totalorder %s18, 3
      %p235 = pnand %p233, %p234
      %p236 = pneg %p235
      // Predicated region
      $region33: #{tpu_custom_call.1} parent=5 // pred_check
        _
      $region34: #{tpu_custom_call.1} parent=5 // pred_check_branch
        %238 = sbr.rel (%p235) target = $region36
      $region35: #{tpu_custom_call.1} parent=5 // pred_region
        %s239 = ssub.s32 %s18, 1
        %s240 = sand.u32 %s43, 1
        %s241 = scalar_lea.sflag [#allocation5], %s240
        %s242 = sand.u32 %s43, 1
        %s243 = smul.addr %s242, 8
        %s244 = scalar_lea.vmem [#allocation4], %s243
        // Predicated region
        $region37: #{tpu_custom_call.1} parent=35 // pred_check
          %p245 = pneg %p56
        $region38: #{tpu_custom_call.1} parent=35 // pred_check_branch
          %247 = sbr.rel (%p245) target = $region40
        $region39: #{tpu_custom_call.1} parent=35 // pred_region
          %249 = dma.done %s241, 128
        $region40: #{tpu_custom_call.1} parent=35 // pred_fallthru
          _
        // Predicated region
        $region41: #{tpu_custom_call.1} parent=35 // pred_check
          %p250 = pneg %p77
        $region42: #{tpu_custom_call.1} parent=35 // pred_check_branch
          %252 = sbr.rel (%p250) target = $region44
        $region43: #{tpu_custom_call.1} parent=35 // pred_region
          %254 = dma.done [#allocation8], 1024
        $region44: #{tpu_custom_call.1} parent=35 // pred_fallthru
          _
        // Predicated region
        $region45: #{tpu_custom_call.1} parent=35 // pred_check
          %p255 = pneg %p98
        $region46: #{tpu_custom_call.1} parent=35 // pred_check_branch
          %257 = sbr.rel (%p255) target = $region48
        $region47: #{tpu_custom_call.1} parent=35 // pred_region
          %259 = dma.done [#allocation8], 32
        $region48: #{tpu_custom_call.1} parent=35 // pred_fallthru
          _
        // Predicated region
        $region49: #{tpu_custom_call.1} parent=35 // pred_check
          %p260 = pneg %p124
        $region50: #{tpu_custom_call.1} parent=35 // pred_check_branch
          %262 = sbr.rel (%p260) target = $region52
        $region51: #{tpu_custom_call.1} parent=35 // pred_region
          %264 = dma.done [#allocation11], 3072
        $region52: #{tpu_custom_call.1} parent=35 // pred_fallthru
          _
        %s265 = sand.u32 %s43, 1
        %s266 = scalar_lea.sflag [#allocation5], %s265
        %s267 = sand.u32 %s43, 1
        %s268 = smul.addr %s267, 8
        %s269 = scalar_lea.vmem [#allocation4], %s268
        %p270 = pneg %p56
        %p271 = pneg %p53
        %p272 = pneg %p77
        %p273 = pneg %p74
        %p274 = pneg %p98
        %p275 = pneg %p95
        %p276 = pneg %p124
        %p277 = pneg %p121
        %p278 = pneg %p152
        %p279 = pneg %p149
        %s280 = sand.u32 %s139, 1
        %s281 = scalar_lea.sflag [#allocation6], %s280
        %s282 = sand.u32 %s139, 1
        %s283 = smul.addr %s282, 32
        %s284 = scalar_lea.vmem [#allocation12], %s283
        %s285 = smul.u32 24, %s28
        %s286 = smul.u32 4, %s28
        %p287 = scmp.eq.s32.totalorder %s28, 0
        // Predicated region
        $region53: #{tpu_custom_call.1} parent=35 // pred_check
          %p288 = pneg %p287
        $region54: #{tpu_custom_call.1} parent=35 // pred_check_branch
          %290 = sbr.rel (%p288) target = $region56
        $region55: #{tpu_custom_call.1} parent=35 // pred_region
          %v291 = vld [vmem:[%s244] sm:$0xff]
          %v292 = vld [vmem:[#allocation7] sm:$0xff]
          %v293 = vld [vmem:[#allocation7 + $0x8] sm:$0xff]
          %v294 = vld [vmem:[#allocation7 + $0x10] sm:$0xff]
          %v295 = vld [vmem:[#allocation7 + $0x18] sm:$0xff]
          %v296 = vld [vmem:[#allocation7 + $0x20] sm:$0xff]
          %v297 = vld [vmem:[#allocation7 + $0x28] sm:$0xff]
          %v298 = vld [vmem:[#allocation7 + $0x30] sm:$0xff]
          %v299 = vld [vmem:[#allocation7 + $0x38] sm:$0xff]
          %v300 = vld [vmem:[#allocation9] sm:$0x3]
          %v302 = vperm.slane %v300, 0
          %v303 = vperm.slane %v300, 1
          %vm306 = vcmask 261120
          %v308 = vsel %vm306, %v291, 0
          %310 = vmatpush.msra.mxu0 0.0
          %311 = vmatpush.msra.mxu0 0.0
          %312 = vmatpush.msra.mxu0 0.0
          %313 = vmatpush.msra.mxu0 0.0
          %314 = vmatpush.msra.mxu0 0.0
          %315 = vmatpush.msra.mxu0 0.0
          %316 = vmatpush.msra.mxu0 0.0
          %317 = vmatpush.msra.mxu0 0.0
          %318 = vmatpush.msra.mxu0 0.0
          %319 = vmatpush.msra.mxu0 0.0
          %320 = vmatpush.msra.mxu0 0.0
          %321 = vmatpush.msra.mxu0 0.0
          %322 = vmatpush.msra.mxu0 %v298
          %323 = vmatpush.msra.mxu0 %v296
          %324 = vmatpush.msra.mxu0 %v294
          %325 = vmatpush.msra.mxu0 %v292
          %326 = vmatmul.f32.gmra.mxu0 %v308
          %v327 = vpop.f32.mrf.mxu0
          %v328 = vadd.f32 %v302, %v327
          %329 = vdwg.mxu0
          %330 = vmatpush.msra.mxu0 0.0
          %331 = vmatpush.msra.mxu0 0.0
          %332 = vmatpush.msra.mxu0 0.0
          %333 = vmatpush.msra.mxu0 0.0
          %334 = vmatpush.msra.mxu0 0.0
          %335 = vmatpush.msra.mxu0 0.0
          %336 = vmatpush.msra.mxu0 0.0
          %337 = vmatpush.msra.mxu0 0.0
          %338 = vmatpush.msra.mxu0 0.0
          %339 = vmatpush.msra.mxu0 0.0
          %340 = vmatpush.msra.mxu0 0.0
          %341 = vmatpush.msra.mxu0 0.0
          %342 = vmatpush.msra.mxu0 %v299
          %343 = vmatpush.msra.mxu0 %v297
          %344 = vmatpush.msra.mxu0 %v295
          %345 = vmatpush.msra.mxu0 %v293
          %346 = vmatmul.f32.gmra.mxu0 %v308
          %v347 = vpop.f32.mrf.mxu0
          %v348 = vadd.f32 %v303, %v347
          %349 = vdwg.mxu0
          %v350 = vmax.f32 %v328, 0.0
          %v351 = vmax.f32 %v348, 0.0
          %352 = vst [vmem:[#allocation3] sm:$0xff] %v350
          %vm353 = vcmask 392192
          %354 = vst.msk [vmem:[#allocation2] sm:$0xff] %vm353, %v351
        $region56: #{tpu_custom_call.1} parent=35 // pred_fallthru
          _
        %v355 = vld [vmem:[#allocation2] sm:$0xff]
        %v356 = vld [vmem:[#allocation3] sm:$0xff]
        %v357 = vld [vmem:[#allocation10] sm:$0xff]
        %v358 = vld [vmem:[#allocation10 + $0x8] sm:$0xff]
        %v359 = vld [vmem:[#allocation10 + $0x10] sm:$0xff]
        %v360 = vld [vmem:[#allocation10 + $0x18] sm:$0xff]
        %v361 = vld [vmem:[#allocation10 + $0x20] sm:$0xff]
        %v362 = vld [vmem:[#allocation10 + $0x28] sm:$0xff]
        %v363 = vld [vmem:[#allocation10 + $0x30] sm:$0xff]
        %v364 = vld [vmem:[#allocation10 + $0x38] sm:$0xff]
        %v365 = vld [vmem:[#allocation10 + $0x40] sm:$0xff]
        %v366 = vld [vmem:[#allocation10 + $0x48] sm:$0xff]
        %v367 = vld [vmem:[#allocation10 + $0x50] sm:$0xff]
        %v368 = vld [vmem:[#allocation10 + $0x58] sm:$0xff]
        %v369 = vld [vmem:[#allocation10 + $0x60] sm:$0xff]
        %v370 = vld [vmem:[#allocation10 + $0x68] sm:$0xff]
        %v371 = vld [vmem:[#allocation10 + $0x70] sm:$0xff]
        %v372 = vld [vmem:[#allocation10 + $0x78] sm:$0xff]
        %v373 = vld [vmem:[#allocation10 + $0x80] sm:$0xff]
        %v374 = vld [vmem:[#allocation10 + $0x88] sm:$0xff]
        %v375 = vld [vmem:[#allocation10 + $0x90] sm:$0xff]
        %v376 = vld [vmem:[#allocation10 + $0x98] sm:$0xff]
        %v377 = vld [vmem:[#allocation10 + $0xa0] sm:$0xff]
        %v378 = vld [vmem:[#allocation10 + $0xa8] sm:$0xff]
        %v379 = vld [vmem:[#allocation10 + $0xb0] sm:$0xff]
        %v380 = vld [vmem:[#allocation10 + $0xb8] sm:$0xff]
        %381 = vmatpush.xpose.msra.mxu0 0.0
        %382 = vmatpush.xpose.msra.mxu0 0.0
        %383 = vmatpush.xpose.msra.mxu0 0.0
        %384 = vmatpush.xpose.msra.mxu0 0.0
        %385 = vmatpush.xpose.msra.mxu0 0.0
        %386 = vmatpush.xpose.msra.mxu0 0.0
        %387 = vmatpush.xpose.msra.mxu0 0.0
        %388 = vmatpush.xpose.msra.mxu0 0.0
        %389 = vmatpush.xpose.msra.mxu0 0.0
        %390 = vmatpush.xpose.msra.mxu0 0.0
        %391 = vmatpush.xpose.msra.mxu0 0.0
        %392 = vmatpush.xpose.msra.mxu0 0.0
        %393 = vmatpush.xpose.msra.mxu0 0.0
        %394 = vmatpush.xpose.msra.mxu0 0.0
        %395 = vmatpush.xpose.msra.mxu0 0.0
        %396 = vmatpush.xpose.msra.mxu0 %v356
        %397 = vmatmul.f32.gmra.mxu0 %v357
        %v398 = vpop.f32.mrf.mxu0
        %v399 = vadd.f32 0.0, %v398
        %400 = vmatmul.f32.gmra.mxu0 %v358
        %v401 = vpop.f32.mrf.mxu0
        %v402 = vadd.f32 0.0, %v401
        %403 = vmatmul.f32.gmra.mxu0 %v359
        %v404 = vpop.f32.mrf.mxu0
        %v405 = vadd.f32 0.0, %v404
        %406 = vmatmul.f32.gmra.mxu0 %v360
        %v407 = vpop.f32.mrf.mxu0
        %v408 = vadd.f32 0.0, %v407
        %409 = vmatmul.f32.gmra.mxu0 %v361
        %v410 = vpop.f32.mrf.mxu0
        %v411 = vadd.f32 0.0, %v410
        %412 = vmatmul.f32.gmra.mxu0 %v362
        %v413 = vpop.f32.mrf.mxu0
        %v414 = vadd.f32 0.0, %v413
        %415 = vmatmul.f32.gmra.mxu0 %v363
        %v416 = vpop.f32.mrf.mxu0
        %v417 = vadd.f32 0.0, %v416
        %418 = vmatmul.f32.gmra.mxu0 %v364
        %v419 = vpop.f32.mrf.mxu0
        %v420 = vadd.f32 0.0, %v419
        %421 = vmatmul.f32.gmra.mxu0 %v365
        %v422 = vpop.f32.mrf.mxu0
        %v423 = vadd.f32 0.0, %v422
        %424 = vmatmul.f32.gmra.mxu0 %v366
        %v425 = vpop.f32.mrf.mxu0
        %v426 = vadd.f32 0.0, %v425
        %427 = vmatmul.f32.gmra.mxu0 %v367
        %v428 = vpop.f32.mrf.mxu0
        %v429 = vadd.f32 0.0, %v428
        %430 = vmatmul.f32.gmra.mxu0 %v368
        %v431 = vpop.f32.mrf.mxu0
        %v432 = vadd.f32 0.0, %v431
        %433 = vmatmul.f32.gmra.mxu0 %v369
        %v434 = vpop.f32.mrf.mxu0
        %v435 = vadd.f32 0.0, %v434
        %436 = vmatmul.f32.gmra.mxu0 %v370
        %v437 = vpop.f32.mrf.mxu0
        %v438 = vadd.f32 0.0, %v437
        %439 = vmatmul.f32.gmra.mxu0 %v371
        %v440 = vpop.f32.mrf.mxu0
        %v441 = vadd.f32 0.0, %v440
        %442 = vmatmul.f32.gmra.mxu0 %v372
        %v443 = vpop.f32.mrf.mxu0
        %v444 = vadd.f32 0.0, %v443
        %445 = vmatmul.f32.gmra.mxu0 %v373
        %v446 = vpop.f32.mrf.mxu0
        %v447 = vadd.f32 0.0, %v446
        %448 = vmatmul.f32.gmra.mxu0 %v374
        %v449 = vpop.f32.mrf.mxu0
        %v450 = vadd.f32 0.0, %v449
        %451 = vmatmul.f32.gmra.mxu0 %v375
        %v452 = vpop.f32.mrf.mxu0
        %v453 = vadd.f32 0.0, %v452
        %454 = vmatmul.f32.gmra.mxu0 %v376
        %v455 = vpop.f32.mrf.mxu0
        %v456 = vadd.f32 0.0, %v455
        %457 = vmatmul.f32.gmra.mxu0 %v377
        %v458 = vpop.f32.mrf.mxu0
        %v459 = vadd.f32 0.0, %v458
        %460 = vmatmul.f32.gmra.mxu0 %v378
        %v461 = vpop.f32.mrf.mxu0
        %v462 = vadd.f32 0.0, %v461
        %463 = vmatmul.f32.gmra.mxu0 %v379
        %v464 = vpop.f32.mrf.mxu0
        %v465 = vadd.f32 0.0, %v464
        %466 = vmatmul.f32.gmra.mxu0 %v380
        %v467 = vpop.f32.mrf.mxu0
        %v468 = vadd.f32 0.0, %v467
        %469 = vdwg.mxu0
        %vm470 = vcmask 392192
        %v472 = vsel %vm470, %v355, 0
        %474 = vmatpush.msra.mxu0 0.0
        %475 = vmatpush.msra.mxu0 0.0
        %476 = vmatpush.msra.mxu0 0.0
        %477 = vmatpush.msra.mxu0 0.0
        %478 = vmatpush.msra.mxu0 0.0
        %479 = vmatpush.msra.mxu0 0.0
        %480 = vmatpush.msra.mxu0 0.0
        %481 = vmatpush.msra.mxu0 0.0
        %482 = vmatpush.msra.mxu0 0.0
        %483 = vmatpush.msra.mxu0 0.0
        %484 = vmatpush.msra.mxu0 %v414
        %485 = vmatpush.msra.mxu0 %v411
        %486 = vmatpush.msra.mxu0 %v408
        %487 = vmatpush.msra.mxu0 %v405
        %488 = vmatpush.msra.mxu0 %v402
        %489 = vmatpush.msra.mxu0 %v399
        %490 = vmatmul.f32.gmra.mxu0 %v472
        %v491 = vpop.f32.mrf.mxu0
        %v492 = vadd.f32 0.0, %v491
        %493 = vdwg.mxu0
        %vm494 = vcmask 64512
        %495 = vst.msk [vmem:[%s284] sm:$0xff] %vm494, %v492
        %496 = vmatpush.msra.mxu0 0.0
        %497 = vmatpush.msra.mxu0 0.0
        %498 = vmatpush.msra.mxu0 0.0
        %499 = vmatpush.msra.mxu0 0.0
        %500 = vmatpush.msra.mxu0 0.0
        %501 = vmatpush.msra.mxu0 0.0
        %502 = vmatpush.msra.mxu0 0.0
        %503 = vmatpush.msra.mxu0 0.0
        %504 = vmatpush.msra.mxu0 0.0
        %505 = vmatpush.msra.mxu0 0.0
        %506 = vmatpush.msra.mxu0 %v432
        %507 = vmatpush.msra.mxu0 %v429
        %508 = vmatpush.msra.mxu0 %v426
        %509 = vmatpush.msra.mxu0 %v423
        %510 = vmatpush.msra.mxu0 %v420
        %511 = vmatpush.msra.mxu0 %v417
        %512 = vmatmul.f32.gmra.mxu0 %v472
        %v513 = vpop.f32.mrf.mxu0
        %v514 = vadd.f32 0.0, %v513
        %515 = vdwg.mxu0
        %s516 = scalar_lea.vmem %s284, 8 [#allocation12]
        %517 = vst.msk [vmem:[%s516] sm:$0xff] %vm494, %v514
        %518 = vmatpush.msra.mxu0 0.0
        %519 = vmatpush.msra.mxu0 0.0
        %520 = vmatpush.msra.mxu0 0.0
        %521 = vmatpush.msra.mxu0 0.0
        %522 = vmatpush.msra.mxu0 0.0
        %523 = vmatpush.msra.mxu0 0.0
        %524 = vmatpush.msra.mxu0 0.0
        %525 = vmatpush.msra.mxu0 0.0
        %526 = vmatpush.msra.mxu0 0.0
        %527 = vmatpush.msra.mxu0 0.0
        %528 = vmatpush.msra.mxu0 %v450
        %529 = vmatpush.msra.mxu0 %v447
        %530 = vmatpush.msra.mxu0 %v444
        %531 = vmatpush.msra.mxu0 %v441
        %532 = vmatpush.msra.mxu0 %v438
        %533 = vmatpush.msra.mxu0 %v435
        %534 = vmatmul.f32.gmra.mxu0 %v472
        %v535 = vpop.f32.mrf.mxu0
        %v536 = vadd.f32 0.0, %v535
        %537 = vdwg.mxu0
        %s538 = scalar_lea.vmem %s284, 16 [#allocation12]
        %539 = vst.msk [vmem:[%s538] sm:$0xff] %vm494, %v536
        %540 = vmatpush.msra.mxu0 0.0
        %541 = vmatpush.msra.mxu0 0.0
        %542 = vmatpush.msra.mxu0 0.0
        %543 = vmatpush.msra.mxu0 0.0
        %544 = vmatpush.msra.mxu0 0.0
        %545 = vmatpush.msra.mxu0 0.0
        %546 = vmatpush.msra.mxu0 0.0
        %547 = vmatpush.msra.mxu0 0.0
        %548 = vmatpush.msra.mxu0 0.0
        %549 = vmatpush.msra.mxu0 0.0
        %550 = vmatpush.msra.mxu0 %v468
        %551 = vmatpush.msra.mxu0 %v465
        %552 = vmatpush.msra.mxu0 %v462
        %553 = vmatpush.msra.mxu0 %v459
        %554 = vmatpush.msra.mxu0 %v456
        %555 = vmatpush.msra.mxu0 %v453
        %556 = vmatmul.f32.gmra.mxu0 %v472
        %v557 = vpop.f32.mrf.mxu0
        %v558 = vadd.f32 0.0, %v557
        %559 = vdwg.mxu0
        %s560 = scalar_lea.vmem %s284, 24 [#allocation12]
        %561 = vst.msk [vmem:[%s560] sm:$0xff] %vm494, %v558
        %s562 = sand.u32 %s139, 1
        %s563 = scalar_lea.sflag [#allocation6], %s562
        %s564 = sand.u32 %s139, 1
        %s565 = smul.addr %s564, 32
        %s566 = scalar_lea.vmem [#allocation12], %s565
        // Predicated region
        $region57: #{tpu_custom_call.1} parent=35 // pred_check
          %p567 = pneg %p149
        $region58: #{tpu_custom_call.1} parent=35 // pred_check_branch
          %569 = sbr.rel (%p567) target = $region60
        $region59: #{tpu_custom_call.1} parent=35 // pred_region
          %s570 = smul.u32 4, %s28
          %572 = vsyncadd %s563, 0
          %s573 = smul.addr %s27, 4
          %s574 = sadd.s32 %s570, %s573
          %s575 = smul.addr %s574, 8
          %s576 = scalar_lea.hbm %s4, %s575
          %s577 = sshll.u32 %s566, 4
          %s578 = int_to_ptr.vmem [resolvable:$true] %s577
          %s579 = sshll.u32 %s576, 4
          %s580 = int_to_ptr.hbm [resolvable:$true] %s579
          %585 = dma.vmem_to_hbm [thread:$0]  %s578, 512, %s580, %s563, 128, 128, 8
        $region60: #{tpu_custom_call.1} parent=35 // pred_fallthru
          _
      $region36: #{tpu_custom_call.1} parent=5 // pred_fallthru
        _
      %p586 = scmp.le.s32.totalorder 2, %s18
      // Predicated region
      $region61: #{tpu_custom_call.1} parent=5 // pred_check
        %p587 = pneg %p586
      $region62: #{tpu_custom_call.1} parent=5 // pred_check_branch
        %589 = sbr.rel (%p587) target = $region64
      $region63: #{tpu_custom_call.1} parent=5 // pred_region
        %s590 = ssub.s32 %s18, 2
        // Predicated region
        $region65: #{tpu_custom_call.1} parent=63 // pred_check
          %p591 = pneg %p155
        $region66: #{tpu_custom_call.1} parent=63 // pred_check_branch
          %593 = sbr.rel (%p591) target = $region68
        $region67: #{tpu_custom_call.1} parent=63 // pred_region
          %s594 = sand.u32 %s140, 1
          %s595 = scalar_lea.sflag [#allocation6], %s594
          %s596 = sand.u32 %s140, 1
          %s597 = smul.addr %s596, 32
          %s598 = scalar_lea.vmem [#allocation12], %s597
          %600 = dma.done %s595, 512
        $region68: #{tpu_custom_call.1} parent=63 // pred_fallthru
          _
      $region64: #{tpu_custom_call.1} parent=5 // pred_fallthru
        _
    $region6: #{tpu_custom_call.1} parent=1 // loop_footer
      %s22 = sadd.s32 1, %s18
    $region7: #{tpu_custom_call.1} parent=1 // loop_footer_branch
      %17 = sbr.rel target = $region3
    $region8: #{tpu_custom_call.1} parent=1 // loop_exit
      _
    %601 = vsyncpa [#allocation5], 1
    %s602 = scalar_lea.sflag [#allocation5], 1
    %603 = vsyncpa %s602, 1
    %604 = vsyncpa [#allocation8], 1
    %605 = vsyncpa [#allocation11], 1
    %606 = vsyncpa [#allocation6], 1
    %s607 = scalar_lea.sflag [#allocation6], 1
    %608 = vsyncpa %s607, 1

</llo_original>
